<compile_context>
chip_gen: v5e
topology: v5e:2x2
jax: 0.10.0
libtpu: 0.0.40
codegen_flags: <defaults>
</compile_context>

<pallas_src>
import jax
import jax.numpy as jnp
from jax.experimental import pallas as pl
from jax.experimental.pallas import tpu as pltpu

# ----------------------------- model config ---------------------------------
OUTPUT_DIM = 32   # vocab size
EMB_DIM = 16
HID_DIM = 32
N_LAYERS = 2
BATCH = 2
DROPOUT = 0.1     # unused at inference
B_PAD = 8         # pad batch to one full sublane group

# Packed layouts below rely on V == H (pred shares the (B_PAD, H) output rows and
# the layer-0 fused K dim V+H equals 2H).
assert OUTPUT_DIM == HID_DIM
GATE_DIM = 4 * HID_DIM        # 128: one MXU tile / one f32 vreg of lanes
FUSED_K = 2 * HID_DIM         # 64: contraction dim of every fused matmul


# ----------------------------- fused Pallas kernel --------------------------
def _decoder_step_kernel(tok_ref,     # VMEM (B_PAD, 1) int32
                         state_ref,   # VMEM (2L, B_PAD, H) f32: [h0, h1, c0, c1]
                         w_ref,       # VMEM (L+1, 2H, 4H) bf16: fused per-layer weights + padded fc
                         b_ref,       # VMEM (L+1, 1, 4H) f32: per-layer biases + padded fc bias
                         out_ref):    # VMEM (2L+1, B_PAD, H) f32: [h0', h1', c0', c1', pred]
    # ---- one-hot tokens (embedding lookup is folded into layer-0 weights) ----
    tok = tok_ref[...]                                              # (B_PAD, 1) int32
    col = jax.lax.broadcasted_iota(jnp.int32, (B_PAD, OUTPUT_DIM), 1)
    x = jnp.where(col == tok, 1.0, 0.0)                             # (B_PAD, V) f32 one-hot

    # ---- both LSTM layers, unrolled (single fused matmul per layer) ----
    for layer in range(N_LAYERS):
        h = state_ref[layer]                                        # (B_PAD, H) f32
        c = state_ref[N_LAYERS + layer]                             # (B_PAD, H) f32

        xh = jnp.concatenate([x, h], axis=-1).astype(jnp.bfloat16)  # (B_PAD, 2H) bf16
        gates = (jnp.dot(xh, w_ref[layer],
                         preferred_element_type=jnp.float32)
                 + b_ref[layer])                                    # (B_PAD, 4H) f32

        # Full-vreg nonlinearities, then slice (PyTorch gate order i, f, g, o).
        sig = jax.nn.sigmoid(gates)
        tnh = jnp.tanh(gates)
        i_g = sig[:, 0 * HID_DIM:1 * HID_DIM]
        f_g = sig[:, 1 * HID_DIM:2 * HID_DIM]
        g_g = tnh[:, 2 * HID_DIM:3 * HID_DIM]
        o_g = sig[:, 3 * HID_DIM:4 * HID_DIM]

        c_new = f_g * c + i_g * g_g
        h_new = o_g * jnp.tanh(c_new)

        out_ref[layer] = h_new
        out_ref[N_LAYERS + layer] = c_new
        x = h_new                                                   # feeds next layer (eval: no dropout)

    # ---- fc_out projection (weight padded into the shared bf16 slab) ----
    w_fc = w_ref[N_LAYERS][:HID_DIM, :]                             # (H, 4H) bf16, cols >= V are zero
    logits = (jnp.dot(x.astype(jnp.bfloat16), w_fc,
                      preferred_element_type=jnp.float32)
              + b_ref[N_LAYERS])                                    # (B_PAD, 4H) f32
    out_ref[2 * N_LAYERS] = logits[:, :OUTPUT_DIM]                  # (B_PAD, V) f32


_VMEM = pl.BlockSpec(memory_space=pltpu.MemorySpace.VMEM)


def _decoder_step(tok_pad, state_pad, params):
    return pl.pallas_call(
        _decoder_step_kernel,
        out_shape=jax.ShapeDtypeStruct((2 * N_LAYERS + 1, B_PAD, HID_DIM),
                                       jnp.float32),
        in_specs=[_VMEM, _VMEM, _VMEM, _VMEM],
        out_specs=_VMEM,
    )(tok_pad, state_pad, params["w"], params["b"])


# ----------------------------- parameter init -------------------------------
def init_params(key):
    """Returns (packed kernel params, raw f32 params for the pure-JAX reference)."""
    keys = jax.random.split(key, 3 + 4 * N_LAYERS)
    k = iter(keys)

    # nn.Embedding(output_dim, emb_dim, padding_idx=0): row 0 zeroed.
    emb = jax.random.normal(next(k), (OUTPUT_DIM, EMB_DIM), jnp.float32)
    emb = emb.at[0].set(0.0)

    bound = 1.0 / jnp.sqrt(HID_DIM)
    w_blocks, b_blocks, raw_lstm = [], [], []
    for layer in range(N_LAYERS):
        in_dim = EMB_DIM if layer == 0 else HID_DIM
        w_ih = jax.random.uniform(next(k), (4 * HID_DIM, in_dim),
                                  jnp.float32, -bound, bound)
        w_hh = jax.random.uniform(next(k), (4 * HID_DIM, HID_DIM),
                                  jnp.float32, -bound, bound)
        b_ih = jax.random.uniform(next(k), (4 * HID_DIM,),
                                  jnp.float32, -bound, bound)
        b_hh = jax.random.uniform(next(k), (4 * HID_DIM,),
                                  jnp.float32, -bound, bound)
        raw_lstm.append((w_ih, w_hh, b_ih, b_hh))

        if layer == 0:
            # Fold the embedding table into layer-0 input weights:
            # x @ W_ih^T == onehot @ (Emb @ W_ih^T).
            ih_block = emb @ w_ih.T                     # (V, 4H)
        else:
            ih_block = w_ih.T                           # (H, 4H)
        w_blocks.append(jnp.concatenate([ih_block, w_hh.T], axis=0))  # (2H, 4H)
        b_blocks.append((b_ih + b_hh).reshape(1, 4 * HID_DIM))        # (1, 4H)

    # nn.Linear(hid_dim, output_dim), zero-padded into the shared slab layout.
    fc_w = jax.random.uniform(next(k), (OUTPUT_DIM, HID_DIM),
                              jnp.float32, -bound, bound)
    fc_b = jax.random.uniform(next(k), (OUTPUT_DIM,),
                              jnp.float32, -bound, bound)
    fc_block = jnp.zeros((FUSED_K, GATE_DIM), jnp.float32)
    fc_block = fc_block.at[:HID_DIM, :OUTPUT_DIM].set(fc_w.T)
    fc_bias = jnp.zeros((1, GATE_DIM), jnp.float32).at[0, :OUTPUT_DIM].set(fc_b)

    params = {
        "w": jnp.stack(w_blocks + [fc_block], axis=0).astype(jnp.bfloat16),  # (3, 64, 128) bf16
        "b": jnp.stack(b_blocks + [fc_bias], axis=0),                        # (3, 1, 128) f32
    }
    raw = {"emb": emb, "lstm": raw_lstm, "fc_w": fc_w, "fc_b": fc_b}
    return params, raw


# ----------------------------- forward ---------------------------------------
@jax.jit
def decoder_forward(params, tokens, hidden, cell):
    """tokens: (B,) int32; hidden/cell: (n_layers, B, H) float32.

    Returns (prediction (B, V), hidden (n_layers, B, H), cell (n_layers, B, H)).
    """
    B = tokens.shape[0]
    # Pad batch to a full sublane group; padded rows use token 0 (zero embedding
    # row after the fold) and zero state, so they stay finite and are sliced off.
    tok_pad = jnp.zeros((B_PAD, 1), jnp.int32).at[:B, 0].set(tokens.astype(jnp.int32))
    state_pad = jnp.zeros((2 * N_LAYERS, B_PAD, HID_DIM), jnp.float32)
    state_pad = state_pad.at[:N_LAYERS, :B, :].set(hidden)
    state_pad = state_pad.at[N_LAYERS:, :B, :].set(cell)

    out = _decoder_step(tok_pad, state_pad, params)
    h_out = out[:N_LAYERS, :B, :]
    c_out = out[N_LAYERS:2 * N_LAYERS, :B, :]
    pred = out[2 * N_LAYERS, :B, :OUTPUT_DIM]
    return pred, h_out, c_out


# ----------------------------- pure-JAX reference ----------------------------
def decoder_reference(raw, tokens, hidden, cell):
    x = raw["emb"][tokens]                              # (B, E)
    h_out, c_out = [], []
    for layer in range(N_LAYERS):
        w_ih, w_hh, b_ih, b_hh = raw["lstm"][layer]
        h, c = hidden[layer], cell[layer]
        gates = x @ w_ih.T + h @ w_hh.T + b_ih + b_hh
        i_g = jax.nn.sigmoid(gates[:, 0 * HID_DIM:1 * HID_DIM])
        f_g = jax.nn.sigmoid(gates[:, 1 * HID_DIM:2 * HID_DIM])
        g_g = jnp.tanh(gates[:, 2 * HID_DIM:3 * HID_DIM])
        o_g = jax.nn.sigmoid(gates[:, 3 * HID_DIM:4 * HID_DIM])
        c_new = f_g * c + i_g * g_g
        h_new = o_g * jnp.tanh(c_new)
        h_out.append(h_new)
        c_out.append(c_new)
        x = h_new
    pred = x @ raw["fc_w"].T + raw["fc_b"]
    return pred, jnp.stack(h_out), jnp.stack(c_out)


# ----------------------------- main ------------------------------------------
if __name__ == "__main__":
    key = jax.random.PRNGKey(0)
    k_param, k_tok, k_h, k_c = jax.random.split(key, 4)

    params, raw = init_params(k_param)

    tokens = jax.random.randint(k_tok, (BATCH,), 0, OUTPUT_DIM, dtype=jnp.int32)
    hidden = jax.random.normal(k_h, (N_LAYERS, BATCH, HID_DIM), jnp.float32)
    cell = jax.random.normal(k_c, (N_LAYERS, BATCH, HID_DIM), jnp.float32)

    pred, h_out, c_out = decoder_forward(params, tokens, hidden, cell)
    jax.block_until_ready((pred, h_out, c_out))

    assert pred.shape == (BATCH, OUTPUT_DIM)
    assert h_out.shape == (N_LAYERS, BATCH, HID_DIM)
    assert c_out.shape == (N_LAYERS, BATCH, HID_DIM)
    assert bool(jnp.isfinite(pred).all())

    # Numerical parity vs. f32 reference (bf16 MXU operands -> loose tolerance).
    pred_r, h_r, c_r = decoder_reference(raw, tokens, hidden, cell)
    assert bool(jnp.allclose(pred, pred_r, atol=5e-2)), "pred mismatch"
    assert bool(jnp.allclose(h_out, h_r, atol=5e-2)), "hidden mismatch"
    assert bool(jnp.allclose(c_out, c_r, atol=5e-2)), "cell mismatch"

    print("KERNEL_OK")
</pallas_src>

<mosaic_0001>
module attributes {stable_mosaic.version = 11 : i64} {
  func.func @_decoder_step_kernel(%arg0: memref<8x1xi32, #tpu.memory_space<vmem>>, %arg1: memref<4x8x32xf32, #tpu.memory_space<vmem>>, %arg2: memref<3x64x128xbf16, #tpu.memory_space<vmem>>, %arg3: memref<3x1x128xf32, #tpu.memory_space<vmem>>, %arg4: memref<5x8x32xf32, #tpu.memory_space<vmem>>) attributes {dimension_semantics = [], scalar_prefetch = 0 : i64, scratch_operands = 0 : i64, tpu.core_type = #tpu.core_type<tc>} {
    %c0 = arith.constant 0 : index
    %c0_0 = arith.constant 0 : index
    %0 = vector.load %arg0[%c0, %c0_0] : memref<8x1xi32, #tpu.memory_space<vmem>>, vector<8x1xi32>
    %1 = tpu.iota {dimensions = array<i32: 1>} : vector<8x32xi32>
    %2 = vector.broadcast %0 : vector<8x1xi32> to vector<8x32xi32>
    %3 = arith.cmpi eq, %1, %2 : vector<8x32xi32>
    %cst = arith.constant 1.000000e+00 : f32
    %cst_1 = arith.constant 0.000000e+00 : f32
    %4 = vector.broadcast %cst : f32 to vector<8x32xf32>
    %5 = vector.broadcast %cst_1 : f32 to vector<8x32xf32>
    %6 = arith.select %3, %4, %5 : vector<8x32xi1>, vector<8x32xf32>
    %c0_2 = arith.constant 0 : index
    %c0_3 = arith.constant 0 : index
    %c0_4 = arith.constant 0 : index
    %7 = vector.load %arg1[%c0_2, %c0_3, %c0_4] : memref<4x8x32xf32, #tpu.memory_space<vmem>>, vector<1x8x32xf32>
    %8 = vector.shape_cast %7 : vector<1x8x32xf32> to vector<8x32xf32>
    %c2 = arith.constant 2 : index
    %c0_5 = arith.constant 0 : index
    %c0_6 = arith.constant 0 : index
    %9 = vector.load %arg1[%c2, %c0_5, %c0_6] : memref<4x8x32xf32, #tpu.memory_space<vmem>>, vector<1x8x32xf32>
    %10 = vector.shape_cast %9 : vector<1x8x32xf32> to vector<8x32xf32>
    %11 = tpu.concatenate %6, %8 in 1 : vector<8x32xf32>, vector<8x32xf32> -> vector<8x64xf32>
    %12 = arith.truncf %11 : vector<8x64xf32> to vector<8x64xbf16>
    %c0_7 = arith.constant 0 : index
    %c0_8 = arith.constant 0 : index
    %c0_9 = arith.constant 0 : index
    %13 = vector.load %arg2[%c0_7, %c0_8, %c0_9] : memref<3x64x128xbf16, #tpu.memory_space<vmem>>, vector<1x64x128xbf16>
    %14 = vector.shape_cast %13 : vector<1x64x128xbf16> to vector<64x128xbf16>
    %cst_10 = arith.constant dense<0.000000e+00> : vector<8x128xf32>
    %15 = tpu.matmul %12, %14, %cst_10 {dimension_numbers = #tpu.dot_dimension_numbers<[1], [0], [0], [1], [0, 0, 1, 1], [], []>} : vector<8x64xbf16>, vector<64x128xbf16>, vector<8x128xf32> -> vector<8x128xf32>
    %c0_11 = arith.constant 0 : index
    %c0_12 = arith.constant 0 : index
    %c0_13 = arith.constant 0 : index
    %16 = vector.load %arg3[%c0_11, %c0_12, %c0_13] : memref<3x1x128xf32, #tpu.memory_space<vmem>>, vector<1x1x128xf32>
    %17 = vector.shape_cast %16 : vector<1x1x128xf32> to vector<1x128xf32>
    %18 = vector.broadcast %17 : vector<1x128xf32> to vector<8x128xf32>
    %19 = arith.addf %15, %18 : vector<8x128xf32>
    %20 = arith.negf %19 : vector<8x128xf32>
    %21 = math.exp %20 : vector<8x128xf32>
    %cst_14 = arith.constant 1.000000e+00 : f32
    %22 = vector.broadcast %cst_14 : f32 to vector<8x128xf32>
    %23 = arith.addf %22, %21 : vector<8x128xf32>
    %24 = arith.divf %22, %23 : vector<8x128xf32>
    %25 = math.tanh %19 : vector<8x128xf32>
    %26 = vector.extract_strided_slice %24 {offsets = [0, 0], sizes = [8, 32], strides = [1, 1]} : vector<8x128xf32> to vector<8x32xf32>
    %27 = vector.extract_strided_slice %24 {offsets = [0, 32], sizes = [8, 32], strides = [1, 1]} : vector<8x128xf32> to vector<8x32xf32>
    %28 = vector.extract_strided_slice %25 {offsets = [0, 64], sizes = [8, 32], strides = [1, 1]} : vector<8x128xf32> to vector<8x32xf32>
    %29 = vector.extract_strided_slice %24 {offsets = [0, 96], sizes = [8, 32], strides = [1, 1]} : vector<8x128xf32> to vector<8x32xf32>
    %30 = arith.mulf %27, %10 : vector<8x32xf32>
    %31 = arith.mulf %26, %28 : vector<8x32xf32>
    %32 = arith.addf %30, %31 : vector<8x32xf32>
    %33 = math.tanh %32 : vector<8x32xf32>
    %34 = arith.mulf %29, %33 : vector<8x32xf32>
    %c0_15 = arith.constant 0 : index
    %c0_16 = arith.constant 0 : index
    %c0_17 = arith.constant 0 : index
    %35 = vector.load %arg4[%c0_15, %c0_16, %c0_17] : memref<5x8x32xf32, #tpu.memory_space<vmem>>, vector<1x8x32xf32>
    %36 = vector.shape_cast %35 : vector<1x8x32xf32> to vector<8x32xf32>
    %37 = vector.shape_cast %34 : vector<8x32xf32> to vector<1x8x32xf32>
    tpu.vector_store %arg4[%c0_15, %c0_16, %c0_17], %37 {strides = array<i32>} : memref<5x8x32xf32, #tpu.memory_space<vmem>>, vector<1x8x32xf32>,
    %c2_18 = arith.constant 2 : index
    %c0_19 = arith.constant 0 : index
    %c0_20 = arith.constant 0 : index
    %38 = vector.load %arg4[%c2_18, %c0_19, %c0_20] : memref<5x8x32xf32, #tpu.memory_space<vmem>>, vector<1x8x32xf32>
    %39 = vector.shape_cast %38 : vector<1x8x32xf32> to vector<8x32xf32>
    %40 = vector.shape_cast %32 : vector<8x32xf32> to vector<1x8x32xf32>
    tpu.vector_store %arg4[%c2_18, %c0_19, %c0_20], %40 {strides = array<i32>} : memref<5x8x32xf32, #tpu.memory_space<vmem>>, vector<1x8x32xf32>,
    %c1 = arith.constant 1 : index
    %c0_21 = arith.constant 0 : index
    %c0_22 = arith.constant 0 : index
    %41 = vector.load %arg1[%c1, %c0_21, %c0_22] : memref<4x8x32xf32, #tpu.memory_space<vmem>>, vector<1x8x32xf32>
    %42 = vector.shape_cast %41 : vector<1x8x32xf32> to vector<8x32xf32>
    %c3 = arith.constant 3 : index
    %c0_23 = arith.constant 0 : index
    %c0_24 = arith.constant 0 : index
    %43 = vector.load %arg1[%c3, %c0_23, %c0_24] : memref<4x8x32xf32, #tpu.memory_space<vmem>>, vector<1x8x32xf32>
    %44 = vector.shape_cast %43 : vector<1x8x32xf32> to vector<8x32xf32>
    %45 = tpu.concatenate %34, %42 in 1 : vector<8x32xf32>, vector<8x32xf32> -> vector<8x64xf32>
    %46 = arith.truncf %45 : vector<8x64xf32> to vector<8x64xbf16>
    %c1_25 = arith.constant 1 : index
    %c0_26 = arith.constant 0 : index
    %c0_27 = arith.constant 0 : index
    %47 = vector.load %arg2[%c1_25, %c0_26, %c0_27] : memref<3x64x128xbf16, #tpu.memory_space<vmem>>, vector<1x64x128xbf16>
    %48 = vector.shape_cast %47 : vector<1x64x128xbf16> to vector<64x128xbf16>
    %cst_28 = arith.constant dense<0.000000e+00> : vector<8x128xf32>
    %49 = tpu.matmul %46, %48, %cst_28 {dimension_numbers = #tpu.dot_dimension_numbers<[1], [0], [0], [1], [0, 0, 1, 1], [], []>} : vector<8x64xbf16>, vector<64x128xbf16>, vector<8x128xf32> -> vector<8x128xf32>
    %c1_29 = arith.constant 1 : index
    %c0_30 = arith.constant 0 : index
    %c0_31 = arith.constant 0 : index
    %50 = vector.load %arg3[%c1_29, %c0_30, %c0_31] : memref<3x1x128xf32, #tpu.memory_space<vmem>>, vector<1x1x128xf32>
    %51 = vector.shape_cast %50 : vector<1x1x128xf32> to vector<1x128xf32>
    %52 = vector.broadcast %51 : vector<1x128xf32> to vector<8x128xf32>
    %53 = arith.addf %49, %52 : vector<8x128xf32>
    %54 = arith.negf %53 : vector<8x128xf32>
    %55 = math.exp %54 : vector<8x128xf32>
    %cst_32 = arith.constant 1.000000e+00 : f32
    %56 = vector.broadcast %cst_32 : f32 to vector<8x128xf32>
    %57 = arith.addf %56, %55 : vector<8x128xf32>
    %58 = arith.divf %56, %57 : vector<8x128xf32>
    %59 = math.tanh %53 : vector<8x128xf32>
    %60 = vector.extract_strided_slice %58 {offsets = [0, 0], sizes = [8, 32], strides = [1, 1]} : vector<8x128xf32> to vector<8x32xf32>
    %61 = vector.extract_strided_slice %58 {offsets = [0, 32], sizes = [8, 32], strides = [1, 1]} : vector<8x128xf32> to vector<8x32xf32>
    %62 = vector.extract_strided_slice %59 {offsets = [0, 64], sizes = [8, 32], strides = [1, 1]} : vector<8x128xf32> to vector<8x32xf32>
    %63 = vector.extract_strided_slice %58 {offsets = [0, 96], sizes = [8, 32], strides = [1, 1]} : vector<8x128xf32> to vector<8x32xf32>
    %64 = arith.mulf %61, %44 : vector<8x32xf32>
    %65 = arith.mulf %60, %62 : vector<8x32xf32>
    %66 = arith.addf %64, %65 : vector<8x32xf32>
    %67 = math.tanh %66 : vector<8x32xf32>
    %68 = arith.mulf %63, %67 : vector<8x32xf32>
    %c1_33 = arith.constant 1 : index
    %c0_34 = arith.constant 0 : index
    %c0_35 = arith.constant 0 : index
    %69 = vector.load %arg4[%c1_33, %c0_34, %c0_35] : memref<5x8x32xf32, #tpu.memory_space<vmem>>, vector<1x8x32xf32>
    %70 = vector.shape_cast %69 : vector<1x8x32xf32> to vector<8x32xf32>
    %71 = vector.shape_cast %68 : vector<8x32xf32> to vector<1x8x32xf32>
    tpu.vector_store %arg4[%c1_33, %c0_34, %c0_35], %71 {strides = array<i32>} : memref<5x8x32xf32, #tpu.memory_space<vmem>>, vector<1x8x32xf32>,
    %c3_36 = arith.constant 3 : index
    %c0_37 = arith.constant 0 : index
    %c0_38 = arith.constant 0 : index
    %72 = vector.load %arg4[%c3_36, %c0_37, %c0_38] : memref<5x8x32xf32, #tpu.memory_space<vmem>>, vector<1x8x32xf32>
    %73 = vector.shape_cast %72 : vector<1x8x32xf32> to vector<8x32xf32>
    %74 = vector.shape_cast %66 : vector<8x32xf32> to vector<1x8x32xf32>
    tpu.vector_store %arg4[%c3_36, %c0_37, %c0_38], %74 {strides = array<i32>} : memref<5x8x32xf32, #tpu.memory_space<vmem>>, vector<1x8x32xf32>,
    %c2_39 = arith.constant 2 : index
    %c0_40 = arith.constant 0 : index
    %c0_41 = arith.constant 0 : index
    %75 = vector.load %arg2[%c2_39, %c0_40, %c0_41] : memref<3x64x128xbf16, #tpu.memory_space<vmem>>, vector<1x64x128xbf16>
    %76 = vector.shape_cast %75 : vector<1x64x128xbf16> to vector<64x128xbf16>
    %77 = vector.extract_strided_slice %76 {offsets = [0, 0], sizes = [32, 128], strides = [1, 1]} : vector<64x128xbf16> to vector<32x128xbf16>
    %78 = arith.truncf %68 : vector<8x32xf32> to vector<8x32xbf16>
    %cst_42 = arith.constant dense<0.000000e+00> : vector<8x128xf32>
    %79 = tpu.matmul %78, %77, %cst_42 {dimension_numbers = #tpu.dot_dimension_numbers<[1], [0], [0], [1], [0, 0, 1, 1], [], []>} : vector<8x32xbf16>, vector<32x128xbf16>, vector<8x128xf32> -> vector<8x128xf32>
    %c2_43 = arith.constant 2 : index
    %c0_44 = arith.constant 0 : index
    %c0_45 = arith.constant 0 : index
    %80 = vector.load %arg3[%c2_43, %c0_44, %c0_45] : memref<3x1x128xf32, #tpu.memory_space<vmem>>, vector<1x1x128xf32>
    %81 = vector.shape_cast %80 : vector<1x1x128xf32> to vector<1x128xf32>
    %82 = vector.broadcast %81 : vector<1x128xf32> to vector<8x128xf32>
    %83 = arith.addf %79, %82 : vector<8x128xf32>
    %84 = vector.extract_strided_slice %83 {offsets = [0, 0], sizes = [8, 32], strides = [1, 1]} : vector<8x128xf32> to vector<8x32xf32>
    %c4 = arith.constant 4 : index
    %c0_46 = arith.constant 0 : index
    %c0_47 = arith.constant 0 : index
    %85 = vector.load %arg4[%c4, %c0_46, %c0_47] : memref<5x8x32xf32, #tpu.memory_space<vmem>>, vector<1x8x32xf32>
    %86 = vector.shape_cast %85 : vector<1x8x32xf32> to vector<8x32xf32>
    %87 = vector.shape_cast %84 : vector<8x32xf32> to vector<1x8x32xf32>
    tpu.vector_store %arg4[%c4, %c0_46, %c0_47], %87 {strides = array<i32>} : memref<5x8x32xf32, #tpu.memory_space<vmem>>, vector<1x8x32xf32>,
    return
  }
}

</mosaic_0001>

<llo_original>
// kernel: decoder_forward.1
$region0: #{decoder_forward.1}
  #allocation0 [shape = 'u32[]', space=smem, size = 0x4, offset = 0x4, fixed_abs, tag = 'smem constant byte address 0x4 - core index']
  #allocation1 [shape = 'u32[72,128]{1,0:T(1,128)}', space=vmem, size = 0x9000, scoped, tag = 'internal scratch']
  %s0 = inlined_call_operand.vmem [shape: s32[8,1], index: 0, kind: input, shape index: {}]
  %s1 = inlined_call_operand.vmem [shape: f32[4,8,32], index: 1, kind: input, shape index: {}]
  %s2 = inlined_call_operand.hbm [shape: bf16[3,64,128], index: 2, kind: input, shape index: {}]
  %s3 = inlined_call_operand.vmem [shape: f32[3,1,128], index: 3, kind: input, shape index: {}]
  %s4 = inlined_call_operand.vmem [shape: f32[5,8,32], index: 4, kind: output, shape index: {}]
  %s5 = sld [smem:[#allocation0]]
  $region30: #{decoder_forward.1} parent=0
    _
  %s7 = ssub.s32 1, %s5
  %s8 = scalar_select 0, %s7, %s5
  $region1: #{decoder_forward.1} parent=0
    #allocation2 [shape = 'u8[49152]{0}', space=vmem, size = 0xc000, scoped, tag = 'input window, operand 2, single buffered']
    #allocation3 [shape = 's32[1]{0}', space=sflag, size = 0x4, scoped, tag = 'scoped memory for decoder_forward.1']
    %9 = vsyncpa [#allocation3], 0
    // Predicated region
    $region2: #{decoder_forward.1} parent=1 // pred_check
      _
    $region3: #{decoder_forward.1} parent=1 // pred_check_branch
      %11 = sbr.rel (0) target = $region5
    $region4: #{decoder_forward.1} parent=1 // pred_region
      _
    $region5: #{decoder_forward.1} parent=1 // pred_fallthru
      _
    // Predicated region
    $region6: #{decoder_forward.1} parent=1 // pred_check
      _
    $region7: #{decoder_forward.1} parent=1 // pred_check_branch
      %13 = sbr.rel (0) target = $region9
    $region8: #{decoder_forward.1} parent=1 // pred_region
      _
    $region9: #{decoder_forward.1} parent=1 // pred_fallthru
      _
    // Predicated region
    $region10: #{decoder_forward.1} parent=1 // pred_check
      _
    $region11: #{decoder_forward.1} parent=1 // pred_check_branch
      %15 = sbr.rel (0) target = $region13
    $region12: #{decoder_forward.1} parent=1 // pred_region
      %17 = vsyncadd [#allocation3], 0
      %s18 = sshll.u32 %s2, 4
      %s19 = int_to_ptr.hbm [resolvable:$true] %s18
      %s20 = sshll.u32 [#allocation2], 4
      %s21 = int_to_ptr.vmem [resolvable:$true] %s20
      %26 = dma.hbm_to_vmem [thread:$0]  %s19, 1536, %s21, [#allocation3], 64, 64, 4
    $region13: #{decoder_forward.1} parent=1 // pred_fallthru
      _
    // Predicated region
    $region14: #{decoder_forward.1} parent=1 // pred_check
      _
    $region15: #{decoder_forward.1} parent=1 // pred_check_branch
      %28 = sbr.rel (0) target = $region17
    $region16: #{decoder_forward.1} parent=1 // pred_region
      _
    $region17: #{decoder_forward.1} parent=1 // pred_fallthru
      _
    // Predicated region
    $region18: #{decoder_forward.1} parent=1 // pred_check
      _
    $region19: #{decoder_forward.1} parent=1 // pred_check_branch
      %30 = sbr.rel (0) target = $region21
    $region20: #{decoder_forward.1} parent=1 // pred_region
      %32 = dma.done [#allocation3], 1536
    $region21: #{decoder_forward.1} parent=1 // pred_fallthru
      _
    %v34 = vld [vmem:[%s0] sm:$0xff]
    %v35 = vlaneseq
    %v36 = vand.u32 %v35, 127
    %37 = vset.pattern.permute.xlu0 0
    %38 = vperm.xlu0 %37, %v34
    %v39 = vpop.permute.xlu0 %38
    %vm40 = vcmp.eq.s32.totalorder %v36, %v39
    %v41 = vsel %vm40, 1.0, 0.0
    %v42 = vld [vmem:[%s1] sm:$0xff]
    %s43 = scalar_lea.vmem %s1, 16
    %v44 = vld [vmem:[%s43] sm:$0xff]
    %46 = vrot.lane.b32.xlu0 %v42, 32
    %v47 = vpop.permute.xlu0 %46
    %vm49 = vcmask 261120
    %v50 = vsel %vm49, %v41, %v47
    %v51 = vpack.c.bf16 %v50, %v50
    %v52 = vld [vmem:[#allocation2] sm:$0xf]
    %v53 = vld [vmem:[#allocation2 + $0x4] sm:$0xf]
    %v54 = vld [vmem:[#allocation2 + $0x8] sm:$0xf]
    %v55 = vld [vmem:[#allocation2 + $0xc] sm:$0xf]
    %v56 = vld [vmem:[#allocation2 + $0x10] sm:$0xf]
    %v57 = vld [vmem:[#allocation2 + $0x14] sm:$0xf]
    %v58 = vld [vmem:[#allocation2 + $0x18] sm:$0xf]
    %v59 = vld [vmem:[#allocation2 + $0x1c] sm:$0xf]
    %v60 = vld [vmem:[%s3] sm:$0x1]
    %v62 = vperm.slane %v60, 0
    %v72 = vunpack.c.l.b16 %v52
    %v73 = vunpack.c.l.b16 %v53
    %v74 = vunpack.c.l.b16 %v54
    %v75 = vunpack.c.l.b16 %v55
    %v76 = vunpack.c.l.b16 %v56
    %v77 = vunpack.c.l.b16 %v57
    %v78 = vunpack.c.l.b16 %v58
    %v79 = vunpack.c.l.b16 %v59
    %v80 = vpack.c.b16 %v73, %v72
    %v81 = vpack.c.b16 %v75, %v74
    %v82 = vpack.c.b16 %v77, %v76
    %v83 = vpack.c.b16 %v79, %v78
    %vm88 = vcmask 523264
    %v90 = vsel %vm88, %v51, 0
    %92 = vmatpush.bf16.msra.mxu0 0
    %93 = vmatpush.bf16.msra.mxu0 0
    %94 = vmatpush.bf16.msra.mxu0 0
    %95 = vmatpush.bf16.msra.mxu0 0
    %96 = vmatpush.bf16.msra.mxu0 %v83
    %97 = vmatpush.bf16.msra.mxu0 %v82
    %98 = vmatpush.bf16.msra.mxu0 %v81
    %99 = vmatpush.bf16.msra.mxu0 %v80
    %100 = vmatmul.bf16.gmra.mxu0 %v90
    %v101 = vpop.f32.mrf.mxu0
    %v102 = vadd.f32 %v62, %v101
    %v103 = vpop.f32.mrf.mxu0
    %104 = vdwg.mxu0
    %v105 = vxor.u32 %v102, 2147483648
    %v106 = vmul.f32 %v105, 1.442695
    %v107 = vpow.pop %v106
    %v108 = vadd.f32 %v107, 1.0
    %v109 = vrcp.pop %v108
    %v110 = vmul.f32 %v108, %v109
    %v111 = vsub.f32 1.0, %v110
    %v112 = vmul.f32 %v109, %v111
    %v113 = vadd.f32 %v109, %v112
    %vm114 = vweird.f32 %v108
    %vm115 = vweird.f32 %v109
    %vm116 = vmor %vm114, %vm115
    %v117 = vsel %vm116, %v109, %v113
    %v118 = vand.u32 2147483647, %v108
    %vm119 = vcmp.eq.f32.partialorder %v118, 8.507059e+37
    %v120 = vand.u32 %v108, 2147483648
    %v121 = vor.u32 1.1754944e-38, %v120
    %v122 = vsel %vm119, %v121, %v117
    %v123 = vmul.f32 1.0, %v122
    %v124 = vtanh.pop %v102
    %126 = vrot.lane.b32.xlu0 %v44, 32
    %v127 = vpop.permute.xlu0 %126
    %v129 = vmul.f32 %v123, %v127
    %131 = vrot.lane.b32.xlu0 %v124, 64
    %v132 = vpop.permute.xlu0 %131
    %v134 = vmul.f32 %v123, %v132
    %136 = vrot.lane.b32.xlu0 %v134, 32
    %v137 = vpop.permute.xlu0 %136
    %v139 = vadd.f32 %v129, %v137
    %v140 = vtanh.pop %v139
    %142 = vrot.lane.b32.xlu0 %v140, 64
    %v143 = vpop.permute.xlu0 %142
    %v145 = vmul.f32 %v123, %v143
    %147 = vrot.lane.b32.xlu0 %v145, 32
    %v148 = vpop.permute.xlu0 %147
    %150 = vst.msk [vmem:[%s4] sm:$0xff] %vm49, %v148
    %152 = vrot.lane.b32.xlu0 %v139, 96
    %v153 = vpop.permute.xlu0 %152
    %s155 = scalar_lea.vmem %s4, 16
    %156 = vst.msk [vmem:[%s155] sm:$0xff] %vm49, %v153
    %s157 = scalar_lea.vmem %s1, 8
    %v158 = vld [vmem:[%s157] sm:$0xff]
    %s159 = scalar_lea.vmem %s1, 24
    %v160 = vld [vmem:[%s159] sm:$0xff]
    %162 = vrot.lane.b32.xlu0 %v158, 32
    %v163 = vpop.permute.xlu0 %162
    %v165 = vsel %vm49, %v148, %v163
    %v166 = vpack.c.bf16 %v165, %v165
    %s167 = scalar_lea.vmem [#allocation2], 32
    %v168 = vld [vmem:[%s167] sm:$0xf]
    %v169 = vld [vmem:[%s167 + $0x4] sm:$0xf]
    %v170 = vld [vmem:[%s167 + $0x8] sm:$0xf]
    %v171 = vld [vmem:[%s167 + $0xc] sm:$0xf]
    %v172 = vld [vmem:[%s167 + $0x10] sm:$0xf]
    %v173 = vld [vmem:[%s167 + $0x14] sm:$0xf]
    %v174 = vld [vmem:[%s167 + $0x18] sm:$0xf]
    %v175 = vld [vmem:[%s167 + $0x1c] sm:$0xf]
    %s176 = scalar_lea.vmem %s3, 1
    %v177 = vld [vmem:[%s176] sm:$0x1]
    %v179 = vperm.slane %v177, 0
    %v189 = vunpack.c.l.b16 %v168
    %v190 = vunpack.c.l.b16 %v169
    %v191 = vunpack.c.l.b16 %v170
    %v192 = vunpack.c.l.b16 %v171
    %v193 = vunpack.c.l.b16 %v172
    %v194 = vunpack.c.l.b16 %v173
    %v195 = vunpack.c.l.b16 %v174
    %v196 = vunpack.c.l.b16 %v175
    %v197 = vpack.c.b16 %v190, %v189
    %v198 = vpack.c.b16 %v192, %v191
    %v199 = vpack.c.b16 %v194, %v193
    %v200 = vpack.c.b16 %v196, %v195
    %v206 = vsel %vm88, %v166, 0
    %208 = vmatpush.bf16.msra.mxu0 0
    %209 = vmatpush.bf16.msra.mxu0 0
    %210 = vmatpush.bf16.msra.mxu0 0
    %211 = vmatpush.bf16.msra.mxu0 0
    %212 = vmatpush.bf16.msra.mxu0 %v200
    %213 = vmatpush.bf16.msra.mxu0 %v199
    %214 = vmatpush.bf16.msra.mxu0 %v198
    %215 = vmatpush.bf16.msra.mxu0 %v197
    %216 = vmatmul.bf16.gmra.mxu0 %v206
    %v217 = vpop.f32.mrf.mxu0
    %v218 = vadd.f32 %v179, %v217
    %v219 = vpop.f32.mrf.mxu0
    %220 = vdwg.mxu0
    %v221 = vxor.u32 %v218, 2147483648
    %v222 = vmul.f32 %v221, 1.442695
    %v223 = vpow.pop %v222
    %v224 = vadd.f32 %v223, 1.0
    %v225 = vrcp.pop %v224
    %v226 = vmul.f32 %v224, %v225
    %v227 = vsub.f32 1.0, %v226
    %v228 = vmul.f32 %v225, %v227
    %v229 = vadd.f32 %v225, %v228
    %vm230 = vweird.f32 %v224
    %vm231 = vweird.f32 %v225
    %vm232 = vmor %vm230, %vm231
    %v233 = vsel %vm232, %v225, %v229
    %v234 = vand.u32 2147483647, %v224
    %vm235 = vcmp.eq.f32.partialorder %v234, 8.507059e+37
    %v236 = vand.u32 %v224, 2147483648
    %v237 = vor.u32 1.1754944e-38, %v236
    %v238 = vsel %vm235, %v237, %v233
    %v239 = vmul.f32 1.0, %v238
    %v240 = vtanh.pop %v218
    %242 = vrot.lane.b32.xlu0 %v160, 32
    %v243 = vpop.permute.xlu0 %242
    %v245 = vmul.f32 %v239, %v243
    %247 = vrot.lane.b32.xlu0 %v240, 64
    %v248 = vpop.permute.xlu0 %247
    %v250 = vmul.f32 %v239, %v248
    %252 = vrot.lane.b32.xlu0 %v250, 32
    %v253 = vpop.permute.xlu0 %252
    %v255 = vadd.f32 %v245, %v253
    %v256 = vtanh.pop %v255
    %258 = vrot.lane.b32.xlu0 %v256, 64
    %v259 = vpop.permute.xlu0 %258
    %v261 = vmul.f32 %v239, %v259
    %263 = vrot.lane.b32.xlu0 %v261, 32
    %v264 = vpop.permute.xlu0 %263
    %s266 = scalar_lea.vmem %s4, 8
    %267 = vst.msk [vmem:[%s266] sm:$0xff] %vm49, %v264
    %269 = vrot.lane.b32.xlu0 %v255, 96
    %v270 = vpop.permute.xlu0 %269
    %s272 = scalar_lea.vmem %s4, 24
    %273 = vst.msk [vmem:[%s272] sm:$0xff] %vm49, %v270
    %s274 = scalar_lea.vmem [#allocation2], 64
    %v275 = vld [vmem:[%s274] sm:$0xf]
    %v276 = vld [vmem:[%s274 + $0x4] sm:$0xf]
    %v277 = vld [vmem:[%s274 + $0x8] sm:$0xf]
    %v278 = vld [vmem:[%s274 + $0xc] sm:$0xf]
    %v279 = vpack.c.bf16 %v261, %v261
    %s280 = scalar_lea.vmem %s3, 2
    %v281 = vld [vmem:[%s280] sm:$0x1]
    %v283 = vperm.slane %v281, 0
    %286 = vrot.lane.b32.xlu0 %v279, 32
    %v287 = vpop.permute.xlu0 %286
    %v292 = vunpack.c.l.b16 %v275
    %v293 = vunpack.c.l.b16 %v276
    %v294 = vunpack.c.l.b16 %v277
    %v295 = vunpack.c.l.b16 %v278
    %v296 = vpack.c.b16 %v293, %v292
    %v297 = vpack.c.b16 %v295, %v294
    %v301 = vsel %vm49, %v287, 0
    %303 = vmatpush.bf16.msra.mxu0 0
    %304 = vmatpush.bf16.msra.mxu0 0
    %305 = vmatpush.bf16.msra.mxu0 0
    %306 = vmatpush.bf16.msra.mxu0 0
    %307 = vmatpush.bf16.msra.mxu0 0
    %308 = vmatpush.bf16.msra.mxu0 0
    %309 = vmatpush.bf16.msra.mxu0 %v297
    %310 = vmatpush.bf16.msra.mxu0 %v296
    %311 = vmatmul.bf16.gmra.mxu0 %v301
    %v312 = vpop.f32.mrf.mxu0
    %v313 = vadd.f32 %v283, %v312
    %v314 = vpop.f32.mrf.mxu0
    %315 = vdwg.mxu0
    %s316 = scalar_lea.vmem %s4, 32
    %317 = vst.msk [vmem:[%s316] sm:$0xff] %vm49, %v313
    // Predicated region
    $region22: #{decoder_forward.1} parent=1 // pred_check
      _
    $region23: #{decoder_forward.1} parent=1 // pred_check_branch
      %319 = sbr.rel (0) target = $region25
    $region24: #{decoder_forward.1} parent=1 // pred_region
      _
    $region25: #{decoder_forward.1} parent=1 // pred_fallthru
      _
    // Predicated region
    $region26: #{decoder_forward.1} parent=1 // pred_check
      _
    $region27: #{decoder_forward.1} parent=1 // pred_check_branch
      %321 = sbr.rel (0) target = $region29
    $region28: #{decoder_forward.1} parent=1 // pred_region
      _
    $region29: #{decoder_forward.1} parent=1 // pred_fallthru
      _
    %322 = vsyncpa [#allocation3], 1

</llo_original>
